<compile_context>
chip_gen: v7x
topology: tpu7x:2x2x1
jax: 0.10.0
libtpu: 0.0.40
codegen_flags: <defaults>
</compile_context>

<pallas_src>
import math

import jax
import jax.numpy as jnp
from jax.experimental import pallas as pl
from jax.experimental.pallas import tpu as pltpu


NUM_PLAYERS = 3                          # -> attack input width = 4*(NUM_PLAYERS-1) = 8
IN_SELF = 4
IN_ATTACK = 4 * (NUM_PLAYERS - 1)
IN_TOTAL = IN_SELF + IN_ATTACK           # 12
HID = 64
HID2 = 2 * HID                           # 128 = one full lane width


def _fcnet_kernel(x_ref,
                  w1_ref, b1_ref,        # fused layer1/attack_layer1  (12,128)/(1,128)
                  w2_ref, b2_ref,        # fused layer2/attack_layer2  (128,128)/(1,128)
                  wf1_ref, bf1_ref,      # final_layer1                (128,64)/(1,64)
                  w3_ref, b3_ref,        # head (layer3) as a row      (1,64)/(1,1)
                  out_ref):
    f32 = jnp.float32
    x = x_ref[...]                                                     # (bB, 12)

    # fused branch layer 1 + 2 (block-diagonal weights), bias + ReLU in f32
    h = jnp.maximum(jnp.dot(x, w1_ref[...], preferred_element_type=f32)
                    + b1_ref[...], 0.0)                                # (bB, 128)
    h = jnp.maximum(jnp.dot(h, w2_ref[...], preferred_element_type=f32)
                    + b2_ref[...], 0.0)                                # (bB, 128)

    # final_layer1 on the implicit concat([h_self, h_attack])
    h = jnp.maximum(jnp.dot(h, wf1_ref[...], preferred_element_type=f32)
                    + bf1_ref[...], 0.0)                               # (bB, 64)

    # head: Linear(64, 1) via VPU multiply + lane reduction (avoid N=1 matmul)
    out_ref[...] = (jnp.sum(h * w3_ref[...], axis=-1, keepdims=True)
                    + b3_ref[...]).astype(out_ref.dtype)               # (bB, 1)


def _round_up(n, m):
    return ((n + m - 1) // m) * m


def _pack_params(p):
    """Build the block-diagonal fused weights from the per-layer params."""
    f32 = jnp.float32
    w1f = jnp.zeros((IN_TOTAL, HID2), f32)
    w1f = w1f.at[:IN_SELF, :HID].set(p["w1"])
    w1f = w1f.at[IN_SELF:, HID:].set(p["wa1"])
    b1f = jnp.concatenate([p["b1"], p["ba1"]], axis=1)                 # (1, 128)

    w2f = jnp.zeros((HID2, HID2), f32)
    w2f = w2f.at[:HID, :HID].set(p["w2"])
    w2f = w2f.at[HID:, HID:].set(p["wa2"])
    b2f = jnp.concatenate([p["b2"], p["ba2"]], axis=1)                 # (1, 128)

    wf1 = jnp.concatenate([p["wf1a"], p["wf1b"]], axis=0)              # (128, 64)
    bf1 = p["bf1"]                                                     # (1, 64)

    w3_row = p["w3"].T                                                 # (1, 64)
    b3 = p["b3"].reshape(1, 1)                                         # (1, 1)
    return w1f, b1f, w2f, b2f, wf1, bf1, w3_row, b3


def fcnet_transfer_forward(x, params, *, block_b=2048):
    """Forward pass.  x: (B, 12) float32.  Returns (B, 1) float32."""
    B = x.shape[0]
    # Batch tile: multiple of 8 sublanes, capped at block_b.  Working set at
    # block_b=2048 is ~2 MiB of activations -> comfortably inside the 32 MiB
    # scoped / 64 MiB physical VMEM on v7x even with double buffering.
    tile = min(block_b, _round_up(B, 8))
    Bp = _round_up(B, tile)
    if Bp != B:
        x = jnp.pad(x, ((0, Bp - B), (0, 0)))
    grid = (Bp // tile,)

    w1f, b1f, w2f, b2f, wf1, bf1, w3_row, b3 = _pack_params(params)

    def resident(shape):
        # full-array block with a constant index map -> loaded once, stays in VMEM
        return pl.BlockSpec(shape, lambda i: (0, 0))

    out = pl.pallas_call(
        _fcnet_kernel,
        out_shape=jax.ShapeDtypeStruct((Bp, 1), jnp.float32),
        grid=grid,
        in_specs=[
            pl.BlockSpec((tile, IN_TOTAL), lambda i: (i, 0)),   # x (streamed)
            resident((IN_TOTAL, HID2)), resident((1, HID2)),    # w1f, b1f
            resident((HID2, HID2)),     resident((1, HID2)),    # w2f, b2f
            resident((HID2, HID)),      resident((1, HID)),     # wf1, bf1
            resident((1, HID)),         resident((1, 1)),       # w3_row, b3
        ],
        out_specs=pl.BlockSpec((tile, 1), lambda i: (i, 0)),
        compiler_params=pltpu.CompilerParams(
            dimension_semantics=("parallel",)),                 # v7x: 2 TCs
    )(x, w1f, b1f, w2f, b2f, wf1, bf1, w3_row, b3)

    return out[:B]


# ----------------------------- init & reference -----------------------------

def _xavier_uniform(key, fan_in, fan_out):
    # Matches nn.init.xavier_uniform_ on a (fan_out, fan_in) torch weight;
    # we generate the already-transposed (fan_in, fan_out) matrix.
    bound = math.sqrt(6.0 / (fan_in + fan_out))
    return jax.random.uniform(key, (fan_in, fan_out), jnp.float32, -bound, bound)


def init_params(key):
    ks = jax.random.split(key, 6)
    w1 = _xavier_uniform(ks[0], IN_SELF, HID)
    w2 = _xavier_uniform(ks[1], HID, HID)
    wa1 = _xavier_uniform(ks[2], IN_ATTACK, HID)
    wa2 = _xavier_uniform(ks[3], HID, HID)
    wf1 = _xavier_uniform(ks[4], 2 * HID, HID)
    w3 = _xavier_uniform(ks[5], HID, 1)
    zeros = lambda n: jnp.zeros((1, n), jnp.float32)
    return {
        "w1": w1, "b1": zeros(HID),
        "w2": w2, "b2": zeros(HID),
        "wa1": wa1, "ba1": zeros(HID),
        "wa2": wa2, "ba2": zeros(HID),
        "wf1a": wf1[:HID], "wf1b": wf1[HID:], "bf1": zeros(HID),
        "w3": w3, "b3": zeros(1),
    }


def _reference_forward(x, p):
    relu = lambda v: jnp.maximum(v, 0.0)
    x1, x2 = x[:, :IN_SELF], x[:, IN_SELF:]
    h1 = relu(relu(x1 @ p["w1"] + p["b1"]) @ p["w2"] + p["b2"])
    h2 = relu(relu(x2 @ p["wa1"] + p["ba1"]) @ p["wa2"] + p["ba2"])
    hf = relu(h1 @ p["wf1a"] + h2 @ p["wf1b"] + p["bf1"])
    return hf @ p["w3"] + p["b3"]


if __name__ == "__main__":
    key = jax.random.PRNGKey(0)
    k_param, k_x = jax.random.split(key)
    params = init_params(k_param)

    B = 512
    x = jax.random.normal(k_x, (B, IN_TOTAL), jnp.float32)

    # block_b=128 -> 4-step batch grid to exercise the pipelined tiling path.
    out = fcnet_transfer_forward(x, params, block_b=128)
    out = jax.block_until_ready(out)

    ref = _reference_forward(x, params)
    assert out.shape == (B, 1)
    assert jnp.allclose(out, ref, atol=1e-5, rtol=1e-5), \
        float(jnp.max(jnp.abs(out - ref)))

    print("KERNEL_OK")
</pallas_src>

<mosaic_0001>
module attributes {stable_mosaic.version = 11 : i64} {
  func.func @_fcnet_kernel(%arg0: i32, %arg1: memref<128x12xf32, #tpu.memory_space<vmem>>, %arg2: memref<12x128xf32, #tpu.memory_space<vmem>>, %arg3: memref<1x128xf32, #tpu.memory_space<vmem>>, %arg4: memref<128x128xf32, #tpu.memory_space<vmem>>, %arg5: memref<1x128xf32, #tpu.memory_space<vmem>>, %arg6: memref<128x64xf32, #tpu.memory_space<vmem>>, %arg7: memref<1x64xf32, #tpu.memory_space<vmem>>, %arg8: memref<1x64xf32, #tpu.memory_space<vmem>>, %arg9: memref<1x1xf32, #tpu.memory_space<vmem>>, %arg10: memref<128x1xf32, #tpu.memory_space<vmem>>) attributes {dimension_semantics = [#tpu.dimension_semantics<parallel>], iteration_bounds = array<i64: 4>, scalar_prefetch = 0 : i64, scratch_operands = 0 : i64, tpu.core_type = #tpu.core_type<tc>, window_params = [{transform_indices = @transform_0, window_bounds = array<i64: 128, 12>}, {pipeline_mode = #tpu.pipeline_mode<synchronous>, transform_indices = @transform_1, window_bounds = array<i64: 12, 128>}, {pipeline_mode = #tpu.pipeline_mode<synchronous>, transform_indices = @transform_2, window_bounds = array<i64: 1, 128>}, {pipeline_mode = #tpu.pipeline_mode<synchronous>, transform_indices = @transform_3, window_bounds = array<i64: 128, 128>}, {pipeline_mode = #tpu.pipeline_mode<synchronous>, transform_indices = @transform_4, window_bounds = array<i64: 1, 128>}, {pipeline_mode = #tpu.pipeline_mode<synchronous>, transform_indices = @transform_5, window_bounds = array<i64: 128, 64>}, {pipeline_mode = #tpu.pipeline_mode<synchronous>, transform_indices = @transform_6, window_bounds = array<i64: 1, 64>}, {pipeline_mode = #tpu.pipeline_mode<synchronous>, transform_indices = @transform_7, window_bounds = array<i64: 1, 64>}, {pipeline_mode = #tpu.pipeline_mode<synchronous>, transform_indices = @transform_8, window_bounds = array<i64: 1, 1>}, {transform_indices = @transform_9, window_bounds = array<i64: 128, 1>}]} {
    %c0 = arith.constant 0 : index
    %c0_0 = arith.constant 0 : index
    %0 = vector.load %arg1[%c0, %c0_0] : memref<128x12xf32, #tpu.memory_space<vmem>>, vector<128x12xf32>
    %c0_1 = arith.constant 0 : index
    %c0_2 = arith.constant 0 : index
    %1 = vector.load %arg2[%c0_1, %c0_2] : memref<12x128xf32, #tpu.memory_space<vmem>>, vector<12x128xf32>
    %cst = arith.constant dense<0.000000e+00> : vector<128x128xf32>
    %2 = tpu.matmul %0, %1, %cst {dimension_numbers = #tpu.dot_dimension_numbers<[1], [0], [0], [1], [0, 0, 1, 1], [], []>} : vector<128x12xf32>, vector<12x128xf32>, vector<128x128xf32> -> vector<128x128xf32>
    %c0_3 = arith.constant 0 : index
    %c0_4 = arith.constant 0 : index
    %3 = vector.load %arg3[%c0_3, %c0_4] : memref<1x128xf32, #tpu.memory_space<vmem>>, vector<1x128xf32>
    %4 = vector.broadcast %3 : vector<1x128xf32> to vector<128x128xf32>
    %5 = arith.addf %2, %4 : vector<128x128xf32>
    %cst_5 = arith.constant 0.000000e+00 : f32
    %6 = vector.broadcast %cst_5 : f32 to vector<128x128xf32>
    %7 = arith.maximumf %5, %6 : vector<128x128xf32>
    %c0_6 = arith.constant 0 : index
    %c0_7 = arith.constant 0 : index
    %8 = vector.load %arg4[%c0_6, %c0_7] : memref<128x128xf32, #tpu.memory_space<vmem>>, vector<128x128xf32>
    %cst_8 = arith.constant dense<0.000000e+00> : vector<128x128xf32>
    %9 = tpu.matmul %7, %8, %cst_8 {dimension_numbers = #tpu.dot_dimension_numbers<[1], [0], [0], [1], [0, 0, 1, 1], [], []>} : vector<128x128xf32>, vector<128x128xf32>, vector<128x128xf32> -> vector<128x128xf32>
    %c0_9 = arith.constant 0 : index
    %c0_10 = arith.constant 0 : index
    %10 = vector.load %arg5[%c0_9, %c0_10] : memref<1x128xf32, #tpu.memory_space<vmem>>, vector<1x128xf32>
    %11 = vector.broadcast %10 : vector<1x128xf32> to vector<128x128xf32>
    %12 = arith.addf %9, %11 : vector<128x128xf32>
    %cst_11 = arith.constant 0.000000e+00 : f32
    %13 = vector.broadcast %cst_11 : f32 to vector<128x128xf32>
    %14 = arith.maximumf %12, %13 : vector<128x128xf32>
    %c0_12 = arith.constant 0 : index
    %c0_13 = arith.constant 0 : index
    %15 = vector.load %arg6[%c0_12, %c0_13] : memref<128x64xf32, #tpu.memory_space<vmem>>, vector<128x64xf32>
    %cst_14 = arith.constant dense<0.000000e+00> : vector<128x64xf32>
    %16 = tpu.matmul %14, %15, %cst_14 {dimension_numbers = #tpu.dot_dimension_numbers<[1], [0], [0], [1], [0, 0, 1, 1], [], []>} : vector<128x128xf32>, vector<128x64xf32>, vector<128x64xf32> -> vector<128x64xf32>
    %c0_15 = arith.constant 0 : index
    %c0_16 = arith.constant 0 : index
    %17 = vector.load %arg7[%c0_15, %c0_16] : memref<1x64xf32, #tpu.memory_space<vmem>>, vector<1x64xf32>
    %18 = vector.broadcast %17 : vector<1x64xf32> to vector<128x64xf32>
    %19 = arith.addf %16, %18 : vector<128x64xf32>
    %cst_17 = arith.constant 0.000000e+00 : f32
    %20 = vector.broadcast %cst_17 : f32 to vector<128x64xf32>
    %21 = arith.maximumf %19, %20 : vector<128x64xf32>
    %c0_18 = arith.constant 0 : index
    %c0_19 = arith.constant 0 : index
    %22 = vector.load %arg8[%c0_18, %c0_19] : memref<1x64xf32, #tpu.memory_space<vmem>>, vector<1x64xf32>
    %23 = vector.broadcast %22 : vector<1x64xf32> to vector<128x64xf32>
    %24 = arith.mulf %21, %23 : vector<128x64xf32>
    %cst_20 = arith.constant dense<0.000000e+00> : vector<128xf32>
    %25 = vector.multi_reduction <add>, %24, %cst_20 [1] : vector<128x64xf32> to vector<128xf32>
    %26 = vector.shape_cast %25 : vector<128xf32> to vector<128x1xf32>
    %c0_21 = arith.constant 0 : index
    %c0_22 = arith.constant 0 : index
    %27 = vector.load %arg9[%c0_21, %c0_22] : memref<1x1xf32, #tpu.memory_space<vmem>>, vector<1x1xf32>
    %28 = vector.broadcast %27 : vector<1x1xf32> to vector<128x1xf32>
    %29 = arith.addf %26, %28 : vector<128x1xf32>
    %c0_23 = arith.constant 0 : index
    %c0_24 = arith.constant 0 : index
    %30 = vector.load %arg10[%c0_23, %c0_24] : memref<128x1xf32, #tpu.memory_space<vmem>>, vector<128x1xf32>
    tpu.vector_store %arg10[%c0_23, %c0_24], %29 {strides = array<i32>} : memref<128x1xf32, #tpu.memory_space<vmem>>, vector<128x1xf32>,
    return
  }
  func.func @transform_0(%arg0: i32) -> (i32, i32) {
    %c0_i32 = arith.constant 0 : i32
    %c0_i32_0 = arith.constant 0 : i32
    return %arg0, %c0_i32 : i32, i32
  }
  func.func @transform_1(%arg0: i32) -> (i32, i32) {
    %c0_i32 = arith.constant 0 : i32
    %c0_i32_0 = arith.constant 0 : i32
    %c0_i32_1 = arith.constant 0 : i32
    return %c0_i32, %c0_i32_0 : i32, i32
  }
  func.func @transform_2(%arg0: i32) -> (i32, i32) {
    %c0_i32 = arith.constant 0 : i32
    %c0_i32_0 = arith.constant 0 : i32
    %c0_i32_1 = arith.constant 0 : i32
    return %c0_i32, %c0_i32_0 : i32, i32
  }
  func.func @transform_3(%arg0: i32) -> (i32, i32) {
    %c0_i32 = arith.constant 0 : i32
    %c0_i32_0 = arith.constant 0 : i32
    %c0_i32_1 = arith.constant 0 : i32
    return %c0_i32, %c0_i32_0 : i32, i32
  }
  func.func @transform_4(%arg0: i32) -> (i32, i32) {
    %c0_i32 = arith.constant 0 : i32
    %c0_i32_0 = arith.constant 0 : i32
    %c0_i32_1 = arith.constant 0 : i32
    return %c0_i32, %c0_i32_0 : i32, i32
  }
  func.func @transform_5(%arg0: i32) -> (i32, i32) {
    %c0_i32 = arith.constant 0 : i32
    %c0_i32_0 = arith.constant 0 : i32
    %c0_i32_1 = arith.constant 0 : i32
    return %c0_i32, %c0_i32_0 : i32, i32
  }
  func.func @transform_6(%arg0: i32) -> (i32, i32) {
    %c0_i32 = arith.constant 0 : i32
    %c0_i32_0 = arith.constant 0 : i32
    %c0_i32_1 = arith.constant 0 : i32
    return %c0_i32, %c0_i32_0 : i32, i32
  }
  func.func @transform_7(%arg0: i32) -> (i32, i32) {
    %c0_i32 = arith.constant 0 : i32
    %c0_i32_0 = arith.constant 0 : i32
    %c0_i32_1 = arith.constant 0 : i32
    return %c0_i32, %c0_i32_0 : i32, i32
  }
  func.func @transform_8(%arg0: i32) -> (i32, i32) {
    %c0_i32 = arith.constant 0 : i32
    %c0_i32_0 = arith.constant 0 : i32
    %c0_i32_1 = arith.constant 0 : i32
    return %c0_i32, %c0_i32_0 : i32, i32
  }
  func.func @transform_9(%arg0: i32) -> (i32, i32) {
    %c0_i32 = arith.constant 0 : i32
    %c0_i32_0 = arith.constant 0 : i32
    return %arg0, %c0_i32 : i32, i32
  }
}

</mosaic_0001>

<llo_original>
// kernel: tpu_custom_call.1
$region0: #{tpu_custom_call.1}
  #allocation0 [shape = 'u32[]', space=smem, size = 0x4, offset = 0x4, fixed_abs, tag = 'smem constant byte address 0x4 - core index']
  #allocation1 [shape = 'u32[144,128]{1,0:T(1,128)}', space=vmem, size = 0x12000, scoped, tag = 'internal scratch']
  #allocation2 [shape = 'f32[1,1]{1,0:T(1,128)S(1)}', space=vmem, size = 0x200, scoped, tag = 'scoped memory for tpu_custom_call.1']
  %s0 = inlined_call_operand.vmem [shape: f32[512,12], index: 0, kind: input, shape index: {}]
  %s1 = inlined_call_operand.vmem [shape: f32[12,128], index: 1, kind: input, shape index: {}]
  %s2 = inlined_call_operand.vmem [shape: f32[1,128], index: 2, kind: input, shape index: {}]
  %s3 = inlined_call_operand.vmem [shape: f32[128,128], index: 3, kind: input, shape index: {}]
  %s4 = inlined_call_operand.vmem [shape: f32[1,128], index: 4, kind: input, shape index: {}]
  %s5 = inlined_call_operand.vmem [shape: f32[128,64], index: 5, kind: input, shape index: {}]
  %s6 = inlined_call_operand.vmem [shape: f32[1,64], index: 6, kind: input, shape index: {}]
  %s7 = inlined_call_operand.vmem [shape: f32[1,64], index: 7, kind: input, shape index: {}]
  %s8 = inlined_call_operand.<no memory space> [shape: f32[1,1], index: 8, kind: input, shape index: {}]
  %s9 = inlined_call_operand.vmem [shape: f32[512,1], index: 9, kind: output, shape index: {}]
  %s10 = sld [smem:[#allocation0]]
  $region69: #{tpu_custom_call.1} parent=0
    _
  %s12 = ssub.s32 1, %s10
  %s13 = scalar_select 0, %s12, %s10
  %v14 = vstv %s8
  %15 = vst [vmem:[#allocation2] sm:$0x1] %v14
  loop: start=0, step=1, limit=6
  $region2: #{tpu_custom_call.1} parent=0 // loop_pre_header
    _
  $region3: #{tpu_custom_call.1} parent=0 // loop_header
    %s17 = sphi 0, %s21
    %p18 = scmp.ge.s32.totalorder %s17, 6
    %s27 = sphi 0, %s29
    %s30 = sphi 0, %s27
    %s31 = sphi 0, %s30
    %s47 = sphi 0, %s31
    %s51 = sphi 0, %s51
    %s53 = sphi 0, %s51
    %s54 = sphi 0, %s53
    %s68 = sphi 0, %s54
    %s72 = sphi 0, %s72
    %s74 = sphi 0, %s72
    %s75 = sphi 0, %s74
    %s89 = sphi 0, %s75
    %s93 = sphi 0, %s93
    %s95 = sphi 0, %s93
    %s96 = sphi 0, %s95
    %s110 = sphi 0, %s96
    %s114 = sphi 0, %s114
    %s116 = sphi 0, %s114
    %s117 = sphi 0, %s116
    %s131 = sphi 0, %s117
    %s135 = sphi 0, %s135
    %s137 = sphi 0, %s135
    %s138 = sphi 0, %s137
    %s152 = sphi 0, %s138
    %s156 = sphi 0, %s156
    %s158 = sphi 0, %s156
    %s159 = sphi 0, %s158
    %s173 = sphi 0, %s159
    %s177 = sphi 0, %s177
    %s179 = sphi 0, %s177
    %s180 = sphi 0, %s179
    %s194 = sphi 0, %s180
    %s198 = sphi 0, %s198
    %s200 = sphi 0, %s198
    %s201 = sphi 0, %s200
    %s215 = sphi 0, %s201
    %s221 = sphi 0, %s223
    %s224 = sphi 0, %s221
    %s225 = sphi 0, %s224
    %s241 = sphi 0, %s225
  $region4: #{tpu_custom_call.1} parent=0 // loop_header_branch
    %20 = sbr.rel (%p18) target = $region8
  $region5: #{tpu_custom_call.1} parent=0 // loop_body
    %s22 = ssub.s32 %s17, 1
    %s23 = ssub.s32 %s17, 2
    %s24 = sadd.s32 %s17, 1
    %s25 = ssub.s32 %s17, %s24
    %p26 = scmp.eq.s32.totalorder %s25, 0
    %s28 = sadd.s32 %s27, 1
    %s29 = scalar_select %p26, %s27, %s28
    %p32 = pneg %p26
    %p33 = scmp.eq.s32.totalorder %s17, 3
    %p34 = por %p32, %p33
    %p35 = scmp.ne.s32.totalorder %s27, %s30
    %p36 = scmp.eq.s32.totalorder %s17, 0
    %p37 = por %p35, %p36
    %p38 = scmp.ne.s32.totalorder %s27, %s30
    %p39 = scmp.eq.s32.totalorder %s22, 3
    %p40 = por %p38, %p39
    %p41 = scmp.ne.s32.totalorder %s30, %s31
    %p42 = scmp.eq.s32.totalorder %s22, 0
    %p43 = por %p41, %p42
    %p44 = scmp.ne.s32.totalorder %s30, %s31
    %p45 = scmp.eq.s32.totalorder %s23, 3
    %p46 = por %p44, %p45
    %p48 = scmp.ne.s32.totalorder %s31, %s47
    %p49 = scmp.eq.s32.totalorder %s23, 0
    %p50 = por %p48, %p49
    %s52 = sadd.s32 %s51, 1
    %p55 = scmp.eq.s32.totalorder %s17, 3
    %p56 = scmp.ne.s32.totalorder %s51, %s53
    %p57 = scmp.eq.s32.totalorder %s17, 0
    %p58 = por %p56, %p57
    %p59 = scmp.ne.s32.totalorder %s51, %s53
    %p60 = scmp.eq.s32.totalorder %s22, 3
    %p61 = por %p59, %p60
    %p62 = scmp.ne.s32.totalorder %s53, %s54
    %p63 = scmp.eq.s32.totalorder %s22, 0
    %p64 = por %p62, %p63
    %p65 = scmp.ne.s32.totalorder %s53, %s54
    %p66 = scmp.eq.s32.totalorder %s23, 3
    %p67 = por %p65, %p66
    %p69 = scmp.ne.s32.totalorder %s54, %s68
    %p70 = scmp.eq.s32.totalorder %s23, 0
    %p71 = por %p69, %p70
    %s73 = sadd.s32 %s72, 1
    %p76 = scmp.eq.s32.totalorder %s17, 3
    %p77 = scmp.ne.s32.totalorder %s72, %s74
    %p78 = scmp.eq.s32.totalorder %s17, 0
    %p79 = por %p77, %p78
    %p80 = scmp.ne.s32.totalorder %s72, %s74
    %p81 = scmp.eq.s32.totalorder %s22, 3
    %p82 = por %p80, %p81
    %p83 = scmp.ne.s32.totalorder %s74, %s75
    %p84 = scmp.eq.s32.totalorder %s22, 0
    %p85 = por %p83, %p84
    %p86 = scmp.ne.s32.totalorder %s74, %s75
    %p87 = scmp.eq.s32.totalorder %s23, 3
    %p88 = por %p86, %p87
    %p90 = scmp.ne.s32.totalorder %s75, %s89
    %p91 = scmp.eq.s32.totalorder %s23, 0
    %p92 = por %p90, %p91
    %s94 = sadd.s32 %s93, 1
    %p97 = scmp.eq.s32.totalorder %s17, 3
    %p98 = scmp.ne.s32.totalorder %s93, %s95
    %p99 = scmp.eq.s32.totalorder %s17, 0
    %p100 = por %p98, %p99
    %p101 = scmp.ne.s32.totalorder %s93, %s95
    %p102 = scmp.eq.s32.totalorder %s22, 3
    %p103 = por %p101, %p102
    %p104 = scmp.ne.s32.totalorder %s95, %s96
    %p105 = scmp.eq.s32.totalorder %s22, 0
    %p106 = por %p104, %p105
    %p107 = scmp.ne.s32.totalorder %s95, %s96
    %p108 = scmp.eq.s32.totalorder %s23, 3
    %p109 = por %p107, %p108
    %p111 = scmp.ne.s32.totalorder %s96, %s110
    %p112 = scmp.eq.s32.totalorder %s23, 0
    %p113 = por %p111, %p112
    %s115 = sadd.s32 %s114, 1
    %p118 = scmp.eq.s32.totalorder %s17, 3
    %p119 = scmp.ne.s32.totalorder %s114, %s116
    %p120 = scmp.eq.s32.totalorder %s17, 0
    %p121 = por %p119, %p120
    %p122 = scmp.ne.s32.totalorder %s114, %s116
    %p123 = scmp.eq.s32.totalorder %s22, 3
    %p124 = por %p122, %p123
    %p125 = scmp.ne.s32.totalorder %s116, %s117
    %p126 = scmp.eq.s32.totalorder %s22, 0
    %p127 = por %p125, %p126
    %p128 = scmp.ne.s32.totalorder %s116, %s117
    %p129 = scmp.eq.s32.totalorder %s23, 3
    %p130 = por %p128, %p129
    %p132 = scmp.ne.s32.totalorder %s117, %s131
    %p133 = scmp.eq.s32.totalorder %s23, 0
    %p134 = por %p132, %p133
    %s136 = sadd.s32 %s135, 1
    %p139 = scmp.eq.s32.totalorder %s17, 3
    %p140 = scmp.ne.s32.totalorder %s135, %s137
    %p141 = scmp.eq.s32.totalorder %s17, 0
    %p142 = por %p140, %p141
    %p143 = scmp.ne.s32.totalorder %s135, %s137
    %p144 = scmp.eq.s32.totalorder %s22, 3
    %p145 = por %p143, %p144
    %p146 = scmp.ne.s32.totalorder %s137, %s138
    %p147 = scmp.eq.s32.totalorder %s22, 0
    %p148 = por %p146, %p147
    %p149 = scmp.ne.s32.totalorder %s137, %s138
    %p150 = scmp.eq.s32.totalorder %s23, 3
    %p151 = por %p149, %p150
    %p153 = scmp.ne.s32.totalorder %s138, %s152
    %p154 = scmp.eq.s32.totalorder %s23, 0
    %p155 = por %p153, %p154
    %s157 = sadd.s32 %s156, 1
    %p160 = scmp.eq.s32.totalorder %s17, 3
    %p161 = scmp.ne.s32.totalorder %s156, %s158
    %p162 = scmp.eq.s32.totalorder %s17, 0
    %p163 = por %p161, %p162
    %p164 = scmp.ne.s32.totalorder %s156, %s158
    %p165 = scmp.eq.s32.totalorder %s22, 3
    %p166 = por %p164, %p165
    %p167 = scmp.ne.s32.totalorder %s158, %s159
    %p168 = scmp.eq.s32.totalorder %s22, 0
    %p169 = por %p167, %p168
    %p170 = scmp.ne.s32.totalorder %s158, %s159
    %p171 = scmp.eq.s32.totalorder %s23, 3
    %p172 = por %p170, %p171
    %p174 = scmp.ne.s32.totalorder %s159, %s173
    %p175 = scmp.eq.s32.totalorder %s23, 0
    %p176 = por %p174, %p175
    %s178 = sadd.s32 %s177, 1
    %p181 = scmp.eq.s32.totalorder %s17, 3
    %p182 = scmp.ne.s32.totalorder %s177, %s179
    %p183 = scmp.eq.s32.totalorder %s17, 0
    %p184 = por %p182, %p183
    %p185 = scmp.ne.s32.totalorder %s177, %s179
    %p186 = scmp.eq.s32.totalorder %s22, 3
    %p187 = por %p185, %p186
    %p188 = scmp.ne.s32.totalorder %s179, %s180
    %p189 = scmp.eq.s32.totalorder %s22, 0
    %p190 = por %p188, %p189
    %p191 = scmp.ne.s32.totalorder %s179, %s180
    %p192 = scmp.eq.s32.totalorder %s23, 3
    %p193 = por %p191, %p192
    %p195 = scmp.ne.s32.totalorder %s180, %s194
    %p196 = scmp.eq.s32.totalorder %s23, 0
    %p197 = por %p195, %p196
    %s199 = sadd.s32 %s198, 1
    %p202 = scmp.eq.s32.totalorder %s17, 3
    %p203 = scmp.ne.s32.totalorder %s198, %s200
    %p204 = scmp.eq.s32.totalorder %s17, 0
    %p205 = por %p203, %p204
    %p206 = scmp.ne.s32.totalorder %s198, %s200
    %p207 = scmp.eq.s32.totalorder %s22, 3
    %p208 = por %p206, %p207
    %p209 = scmp.ne.s32.totalorder %s200, %s201
    %p210 = scmp.eq.s32.totalorder %s22, 0
    %p211 = por %p209, %p210
    %p212 = scmp.ne.s32.totalorder %s200, %s201
    %p213 = scmp.eq.s32.totalorder %s23, 3
    %p214 = por %p212, %p213
    %p216 = scmp.ne.s32.totalorder %s201, %s215
    %p217 = scmp.eq.s32.totalorder %s23, 0
    %p218 = por %p216, %p217
    %s219 = ssub.s32 %s17, %s24
    %p220 = scmp.eq.s32.totalorder %s219, 0
    %s222 = sadd.s32 %s221, 1
    %s223 = scalar_select %p220, %s221, %s222
    %p226 = pneg %p220
    %p227 = scmp.eq.s32.totalorder %s17, 3
    %p228 = por %p226, %p227
    %p229 = scmp.ne.s32.totalorder %s221, %s224
    %p230 = scmp.eq.s32.totalorder %s17, 0
    %p231 = por %p229, %p230
    %p232 = scmp.ne.s32.totalorder %s221, %s224
    %p233 = scmp.eq.s32.totalorder %s22, 3
    %p234 = por %p232, %p233
    %p235 = scmp.ne.s32.totalorder %s224, %s225
    %p236 = scmp.eq.s32.totalorder %s22, 0
    %p237 = por %p235, %p236
    %p238 = scmp.ne.s32.totalorder %s224, %s225
    %p239 = scmp.eq.s32.totalorder %s23, 3
    %p240 = por %p238, %p239
    %p242 = scmp.ne.s32.totalorder %s225, %s241
    %p243 = scmp.eq.s32.totalorder %s23, 0
    %p244 = por %p242, %p243
    %p245 = scmp.le.s32.totalorder 1, %s17
    %p246 = scmp.lt.s32.totalorder %s17, 5
    %p247 = pnand %p245, %p246
    %p248 = pneg %p247
    // Predicated region
    $region9: #{tpu_custom_call.1} parent=5 // pred_check
      _
    $region10: #{tpu_custom_call.1} parent=5 // pred_check_branch
      %250 = sbr.rel (%p247) target = $region12
    $region11: #{tpu_custom_call.1} parent=5 // pred_region
      %s251 = ssub.s32 %s17, 1
      // Predicated region
      $region13: #{tpu_custom_call.1} parent=11 // pred_check
        %p252 = pneg %p64
      $region14: #{tpu_custom_call.1} parent=11 // pred_check_branch
        %254 = sbr.rel (%p252) target = $region16
      $region15: #{tpu_custom_call.1} parent=11 // pred_region
        _
      $region16: #{tpu_custom_call.1} parent=11 // pred_fallthru
        _
      // Predicated region
      $region17: #{tpu_custom_call.1} parent=11 // pred_check
        %p255 = pneg %p85
      $region18: #{tpu_custom_call.1} parent=11 // pred_check_branch
        %257 = sbr.rel (%p255) target = $region20
      $region19: #{tpu_custom_call.1} parent=11 // pred_region
        _
      $region20: #{tpu_custom_call.1} parent=11 // pred_fallthru
        _
      // Predicated region
      $region21: #{tpu_custom_call.1} parent=11 // pred_check
        %p258 = pneg %p106
      $region22: #{tpu_custom_call.1} parent=11 // pred_check_branch
        %260 = sbr.rel (%p258) target = $region24
      $region23: #{tpu_custom_call.1} parent=11 // pred_region
        _
      $region24: #{tpu_custom_call.1} parent=11 // pred_fallthru
        _
      // Predicated region
      $region25: #{tpu_custom_call.1} parent=11 // pred_check
        %p261 = pneg %p127
      $region26: #{tpu_custom_call.1} parent=11 // pred_check_branch
        %263 = sbr.rel (%p261) target = $region28
      $region27: #{tpu_custom_call.1} parent=11 // pred_region
        _
      $region28: #{tpu_custom_call.1} parent=11 // pred_fallthru
        _
      // Predicated region
      $region29: #{tpu_custom_call.1} parent=11 // pred_check
        %p264 = pneg %p148
      $region30: #{tpu_custom_call.1} parent=11 // pred_check_branch
        %266 = sbr.rel (%p264) target = $region32
      $region31: #{tpu_custom_call.1} parent=11 // pred_region
        _
      $region32: #{tpu_custom_call.1} parent=11 // pred_fallthru
        _
      // Predicated region
      $region33: #{tpu_custom_call.1} parent=11 // pred_check
        %p267 = pneg %p169
      $region34: #{tpu_custom_call.1} parent=11 // pred_check_branch
        %269 = sbr.rel (%p267) target = $region36
      $region35: #{tpu_custom_call.1} parent=11 // pred_region
        _
      $region36: #{tpu_custom_call.1} parent=11 // pred_fallthru
        _
      // Predicated region
      $region37: #{tpu_custom_call.1} parent=11 // pred_check
        %p270 = pneg %p190
      $region38: #{tpu_custom_call.1} parent=11 // pred_check_branch
        %272 = sbr.rel (%p270) target = $region40
      $region39: #{tpu_custom_call.1} parent=11 // pred_region
        _
      $region40: #{tpu_custom_call.1} parent=11 // pred_fallthru
        _
      // Predicated region
      $region41: #{tpu_custom_call.1} parent=11 // pred_check
        %p273 = pneg %p211
      $region42: #{tpu_custom_call.1} parent=11 // pred_check_branch
        %275 = sbr.rel (%p273) target = $region44
      $region43: #{tpu_custom_call.1} parent=11 // pred_region
        _
      $region44: #{tpu_custom_call.1} parent=11 // pred_fallthru
        _
    $region12: #{tpu_custom_call.1} parent=5 // pred_fallthru
      _
    %p276 = scmp.lt.s32.totalorder %s17, 4
    // Predicated region
    $region45: #{tpu_custom_call.1} parent=5 // pred_check
      %p277 = pneg %p276
    $region46: #{tpu_custom_call.1} parent=5 // pred_check_branch
      %279 = sbr.rel (%p277) target = $region48
    $region47: #{tpu_custom_call.1} parent=5 // pred_region
      // Predicated region
      $region49: #{tpu_custom_call.1} parent=47 // pred_check
        %p280 = pneg %p37
      $region50: #{tpu_custom_call.1} parent=47 // pred_check_branch
        %282 = sbr.rel (%p280) target = $region52
      $region51: #{tpu_custom_call.1} parent=47 // pred_region
        %s283 = smul.u32 16, %s17
        %p284 = scmp.lt.s32.totalorder %s283, 63
        %s285 = scalar_select %p284, %s283, 63
        %s286 = smul.addr %s285, 8
        %s287 = scalar_lea.vmem %s0, %s286
        %s288 = smul.u32 16, %s17
      $region52: #{tpu_custom_call.1} parent=47 // pred_fallthru
        _
    $region48: #{tpu_custom_call.1} parent=5 // pred_fallthru
      _
    %p289 = scmp.le.s32.totalorder 1, %s17
    %p290 = scmp.lt.s32.totalorder %s17, 5
    %p291 = pnand %p289, %p290
    %p292 = pneg %p291
    // Predicated region
    $region53: #{tpu_custom_call.1} parent=5 // pred_check
      _
    $region54: #{tpu_custom_call.1} parent=5 // pred_check_branch
      %294 = sbr.rel (%p291) target = $region56
    $region55: #{tpu_custom_call.1} parent=5 // pred_region
      %s295 = ssub.s32 %s17, 1
      %s296 = smul.u32 16, %s22
      %p297 = scmp.lt.s32.totalorder %s296, 63
      %s298 = scalar_select %p297, %s296, 63
      %s299 = smul.addr %s298, 8
      %s300 = scalar_lea.vmem %s0, %s299
      %p301 = pneg %p43
      %p302 = pneg %p40
      %p303 = pneg %p64
      %p304 = pneg %p61
      %p305 = pneg %p85
      %p306 = pneg %p82
      %p307 = pneg %p106
      %p308 = pneg %p103
      %p309 = pneg %p127
      %p310 = pneg %p124
      %p311 = pneg %p148
      %p312 = pneg %p145
      %p313 = pneg %p169
      %p314 = pneg %p166
      %p315 = pneg %p190
      %p316 = pneg %p187
      %p317 = pneg %p211
      %p318 = pneg %p208
      %p319 = pneg %p237
      %p320 = pneg %p234
      %s321 = smul.u32 16, %s22
      %p322 = scmp.lt.s32.totalorder %s321, 63
      %s323 = scalar_select %p322, %s321, 63
      %s324 = smul.addr %s323, 8
      %s325 = scalar_lea.vmem %s9, %s324
      %s326 = smul.u32 16, %s22
      %p327 = scmp.lt.s32.totalorder %s326, 63
      %s328 = scalar_select %p327, %s326, 63
      %s329 = smul.addr %s328, 8
      %s330 = scalar_lea.vmem %s0, %s329
      %s331 = smul.u32 16, %s22
      %s332 = smul.u32 16, %s22
      %p333 = scmp.lt.s32.totalorder %s332, 63
      %s334 = scalar_select %p333, %s332, 63
      %s335 = smul.addr %s334, 8
      %s336 = scalar_lea.vmem %s9, %s335
      %s337 = smul.u32 16, %s22
      %v338 = vld [vmem:[%s330] sm:$0xff]
      %v339 = vld [vmem:[%s330 + $0x8] sm:$0xff]
      %v340 = vld [vmem:[%s330 + $0x10] sm:$0xff]
      %v341 = vld [vmem:[%s330 + $0x18] sm:$0xff]
      %v342 = vld [vmem:[%s330 + $0x20] sm:$0xff]
      %v343 = vld [vmem:[%s330 + $0x28] sm:$0xff]
      %v344 = vld [vmem:[%s330 + $0x30] sm:$0xff]
      %v345 = vld [vmem:[%s330 + $0x38] sm:$0xff]
      %v346 = vld [vmem:[%s330 + $0x40] sm:$0xff]
      %v347 = vld [vmem:[%s330 + $0x48] sm:$0xff]
      %v348 = vld [vmem:[%s330 + $0x50] sm:$0xff]
      %v349 = vld [vmem:[%s330 + $0x58] sm:$0xff]
      %v350 = vld [vmem:[%s330 + $0x60] sm:$0xff]
      %v351 = vld [vmem:[%s330 + $0x68] sm:$0xff]
      %v352 = vld [vmem:[%s330 + $0x70] sm:$0xff]
      %v353 = vld [vmem:[%s330 + $0x78] sm:$0xff]
      %v354 = vld [vmem:[%s1] sm:$0xff]
      %v355 = vld [vmem:[%s1 + $0x8] sm:$0xf]
      %v356 = vld [vmem:[%s2] sm:$0x1]
      %v358 = vlaneseq
      %v359 = vshrl.u32 %v358, 7
      %v360 = vsub.s32 0, %v359
      %v361 = vrot.slane %v356, %v360
      %vm363 = vcmask 97280
      %v365 = vsel %vm363, %v338, 0
      %v368 = vsel %vm363, %v339, 0
      %v371 = vsel %vm363, %v340, 0
      %v374 = vsel %vm363, %v341, 0
      %v377 = vsel %vm363, %v342, 0
      %v380 = vsel %vm363, %v343, 0
      %v383 = vsel %vm363, %v344, 0
      %v386 = vsel %vm363, %v345, 0
      %v389 = vsel %vm363, %v346, 0
      %v392 = vsel %vm363, %v347, 0
      %v395 = vsel %vm363, %v348, 0
      %v398 = vsel %vm363, %v349, 0
      %v401 = vsel %vm363, %v350, 0
      %v404 = vsel %vm363, %v351, 0
      %v407 = vsel %vm363, %v352, 0
      %v410 = vsel %vm363, %v353, 0
      %vm412 = vcmask 1043456
      %v414 = vsel %vm412, %v355, 0
      %416 = vmatprep.subr.mxu0 0.0
      %417 = vmatpush1.msra.mxu0 %v354
      %418 = vmatprep.subr.mxu0 0.0
      %419 = vmatpush1.msra.mxu0 %v414
      %420 = vmatprep.subr.mxu0 0.0
      %421 = vmatpush1.msra.mxu0 0.0
      %422 = vmatprep.subr.mxu0 0.0
      %423 = vmatpush1.msra.mxu0 0.0
      %424 = vmatprep.subr.mxu0 0.0
      %425 = vmatpush1.msra.mxu0 0.0
      %426 = vmatprep.subr.mxu0 0.0
      %427 = vmatpush1.msra.mxu0 0.0
      %428 = vmatprep.subr.mxu0 0.0
      %429 = vmatpush1.msra.mxu0 0.0
      %430 = vmatprep.subr.mxu0 0.0
      %431 = vmatpush1.msra.mxu0 0.0
      %432 = vmatprep.subr.mxu0 0.0
      %433 = vmatpush1.msra.mxu0 0.0
      %434 = vmatprep.subr.mxu0 0.0
      %435 = vmatpush1.msra.mxu0 0.0
      %436 = vmatprep.subr.mxu0 0.0
      %437 = vmatpush1.msra.mxu0 0.0
      %438 = vmatprep.subr.mxu0 0.0
      %439 = vmatpush1.msra.mxu0 0.0
      %440 = vmatprep.subr.mxu0 0.0
      %441 = vmatpush1.msra.mxu0 0.0
      %442 = vmatprep.subr.mxu0 0.0
      %443 = vmatpush1.msra.mxu0 0.0
      %444 = vmatprep.subr.mxu0 0.0
      %445 = vmatpush1.msra.mxu0 0.0
      %446 = vmatprep.subr.mxu0 0.0
      %447 = vmatpush1.msra.mxu0 0.0
      %448 = vmatprep.subr.mxu0 0.0
      %449 = vmatpush1.msra.mxu0 0.0
      %450 = vmatprep.subr.mxu0 0.0
      %451 = vmatpush1.msra.mxu0 0.0
      %452 = vmatprep.subr.mxu0 0.0
      %453 = vmatpush1.msra.mxu0 0.0
      %454 = vmatprep.subr.mxu0 0.0
      %455 = vmatpush1.msra.mxu0 0.0
      %456 = vmatprep.subr.mxu0 0.0
      %457 = vmatpush1.msra.mxu0 0.0
      %458 = vmatprep.subr.mxu0 0.0
      %459 = vmatpush1.msra.mxu0 0.0
      %460 = vmatprep.subr.mxu0 0.0
      %461 = vmatpush1.msra.mxu0 0.0
      %462 = vmatprep.subr.mxu0 0.0
      %463 = vmatpush1.msra.mxu0 0.0
      %464 = vmatprep.subr.mxu0 0.0
      %465 = vmatpush1.msra.mxu0 0.0
      %466 = vmatprep.subr.mxu0 0.0
      %467 = vmatpush1.msra.mxu0 0.0
      %468 = vmatprep.subr.mxu0 0.0
      %469 = vmatpush1.msra.mxu0 0.0
      %470 = vmatprep.subr.mxu0 0.0
      %471 = vmatpush1.msra.mxu0 0.0
      %472 = vmatprep.subr.mxu0 0.0
      %473 = vmatpush1.msra.mxu0 0.0
      %474 = vmatprep.subr.mxu0 0.0
      %475 = vmatpush1.msra.mxu0 0.0
      %476 = vmatprep.subr.mxu0 0.0
      %477 = vmatpush1.msra.mxu0 0.0
      %478 = vmatprep.subr.mxu0 0.0
      %479 = vmatpush1.msra.mxu0 0.0
      %480 = vmatprep.mubr.f32.mxu0 0.0
      %481 = vmatmul.mubr.f32.gmra.mrb[0].mxu0 %v365
      %v482 = vpop.f32.mrb[0].mxu0
      %v483 = vadd.f32 %v361, %v482
      %v484 = vpop.f32.mrb[0].mxu0
      %485 = vmatprep.mubr.f32.mxu0 0.0
      %486 = vmatmul.mubr.f32.gmra.mrb[0].mxu0 %v368
      %v487 = vpop.f32.mrb[0].mxu0
      %v488 = vadd.f32 %v361, %v487
      %v489 = vpop.f32.mrb[0].mxu0
      %490 = vmatprep.mubr.f32.mxu0 0.0
      %491 = vmatmul.mubr.f32.gmra.mrb[0].mxu0 %v371
      %v492 = vpop.f32.mrb[0].mxu0
      %v493 = vadd.f32 %v361, %v492
      %v494 = vpop.f32.mrb[0].mxu0
      %495 = vmatprep.mubr.f32.mxu0 0.0
      %496 = vmatmul.mubr.f32.gmra.mrb[0].mxu0 %v374
      %v497 = vpop.f32.mrb[0].mxu0
      %v498 = vadd.f32 %v361, %v497
      %v499 = vpop.f32.mrb[0].mxu0
      %500 = vmatprep.mubr.f32.mxu0 0.0
      %501 = vmatmul.mubr.f32.gmra.mrb[0].mxu0 %v377
      %v502 = vpop.f32.mrb[0].mxu0
      %v503 = vadd.f32 %v361, %v502
      %v504 = vpop.f32.mrb[0].mxu0
      %505 = vmatprep.mubr.f32.mxu0 0.0
      %506 = vmatmul.mubr.f32.gmra.mrb[0].mxu0 %v380
      %v507 = vpop.f32.mrb[0].mxu0
      %v508 = vadd.f32 %v361, %v507
      %v509 = vpop.f32.mrb[0].mxu0
      %510 = vmatprep.mubr.f32.mxu0 0.0
      %511 = vmatmul.mubr.f32.gmra.mrb[0].mxu0 %v383
      %v512 = vpop.f32.mrb[0].mxu0
      %v513 = vadd.f32 %v361, %v512
      %v514 = vpop.f32.mrb[0].mxu0
      %515 = vmatprep.mubr.f32.mxu0 0.0
      %516 = vmatmul.mubr.f32.gmra.mrb[0].mxu0 %v386
      %v517 = vpop.f32.mrb[0].mxu0
      %v518 = vadd.f32 %v361, %v517
      %v519 = vpop.f32.mrb[0].mxu0
      %520 = vmatprep.mubr.f32.mxu0 0.0
      %521 = vmatmul.mubr.f32.gmra.mrb[0].mxu0 %v389
      %v522 = vpop.f32.mrb[0].mxu0
      %v523 = vadd.f32 %v361, %v522
      %v524 = vpop.f32.mrb[0].mxu0
      %525 = vmatprep.mubr.f32.mxu0 0.0
      %526 = vmatmul.mubr.f32.gmra.mrb[0].mxu0 %v392
      %v527 = vpop.f32.mrb[0].mxu0
      %v528 = vadd.f32 %v361, %v527
      %v529 = vpop.f32.mrb[0].mxu0
      %530 = vmatprep.mubr.f32.mxu0 0.0
      %531 = vmatmul.mubr.f32.gmra.mrb[0].mxu0 %v395
      %v532 = vpop.f32.mrb[0].mxu0
      %v533 = vadd.f32 %v361, %v532
      %v534 = vpop.f32.mrb[0].mxu0
      %535 = vmatprep.mubr.f32.mxu0 0.0
      %536 = vmatmul.mubr.f32.gmra.mrb[0].mxu0 %v398
      %v537 = vpop.f32.mrb[0].mxu0
      %v538 = vadd.f32 %v361, %v537
      %v539 = vpop.f32.mrb[0].mxu0
      %540 = vmatprep.mubr.f32.mxu0 0.0
      %541 = vmatmul.mubr.f32.gmra.mrb[0].mxu0 %v401
      %v542 = vpop.f32.mrb[0].mxu0
      %v543 = vadd.f32 %v361, %v542
      %v544 = vpop.f32.mrb[0].mxu0
      %545 = vmatprep.mubr.f32.mxu0 0.0
      %546 = vmatmul.mubr.f32.gmra.mrb[0].mxu0 %v404
      %v547 = vpop.f32.mrb[0].mxu0
      %v548 = vadd.f32 %v361, %v547
      %v549 = vpop.f32.mrb[0].mxu0
      %550 = vmatprep.mubr.f32.mxu0 0.0
      %551 = vmatmul.mubr.f32.gmra.mrb[0].mxu0 %v407
      %v552 = vpop.f32.mrb[0].mxu0
      %v553 = vadd.f32 %v361, %v552
      %v554 = vpop.f32.mrb[0].mxu0
      %555 = vmatprep.mubr.f32.mxu0 0.0
      %556 = vmatmul.mubr.f32.gmra.mrb[0].mxu0 %v410
      %v557 = vpop.f32.mrb[0].mxu0
      %v558 = vadd.f32 %v361, %v557
      %v559 = vpop.f32.mrb[0].mxu0
      %560 = vdwg.mxu0
      %v561 = vmax.f32 %v483, 0.0
      %v562 = vmax.f32 %v488, 0.0
      %v563 = vmax.f32 %v493, 0.0
      %v564 = vmax.f32 %v498, 0.0
      %v565 = vmax.f32 %v503, 0.0
      %v566 = vmax.f32 %v508, 0.0
      %v567 = vmax.f32 %v513, 0.0
      %v568 = vmax.f32 %v518, 0.0
      %v569 = vmax.f32 %v523, 0.0
      %v570 = vmax.f32 %v528, 0.0
      %v571 = vmax.f32 %v533, 0.0
      %v572 = vmax.f32 %v538, 0.0
      %v573 = vmax.f32 %v543, 0.0
      %v574 = vmax.f32 %v548, 0.0
      %v575 = vmax.f32 %v553, 0.0
      %v576 = vmax.f32 %v558, 0.0
      %v577 = vld [vmem:[%s3] sm:$0xff]
      %v578 = vld [vmem:[%s3 + $0x8] sm:$0xff]
      %v579 = vld [vmem:[%s3 + $0x10] sm:$0xff]
      %v580 = vld [vmem:[%s3 + $0x18] sm:$0xff]
      %v581 = vld [vmem:[%s3 + $0x20] sm:$0xff]
      %v582 = vld [vmem:[%s3 + $0x28] sm:$0xff]
      %v583 = vld [vmem:[%s3 + $0x30] sm:$0xff]
      %v584 = vld [vmem:[%s3 + $0x38] sm:$0xff]
      %v585 = vld [vmem:[%s3 + $0x40] sm:$0xff]
      %v586 = vld [vmem:[%s3 + $0x48] sm:$0xff]
      %v587 = vld [vmem:[%s3 + $0x50] sm:$0xff]
      %v588 = vld [vmem:[%s3 + $0x58] sm:$0xff]
      %v589 = vld [vmem:[%s3 + $0x60] sm:$0xff]
      %v590 = vld [vmem:[%s3 + $0x68] sm:$0xff]
      %v591 = vld [vmem:[%s3 + $0x70] sm:$0xff]
      %v592 = vld [vmem:[%s3 + $0x78] sm:$0xff]
      %v593 = vld [vmem:[%s4] sm:$0x1]
      %v595 = vlaneseq
      %v596 = vshrl.u32 %v595, 7
      %v597 = vsub.s32 0, %v596
      %v598 = vrot.slane %v593, %v597
      %600 = vmatprep.subr.mxu0 0.0
      %601 = vmatpush1.msra.mxu0 %v577
      %602 = vmatprep.subr.mxu0 0.0
      %603 = vmatpush1.msra.mxu0 %v578
      %604 = vmatprep.subr.mxu0 0.0
      %605 = vmatpush1.msra.mxu0 %v579
      %606 = vmatprep.subr.mxu0 0.0
      %607 = vmatpush1.msra.mxu0 %v580
      %608 = vmatprep.subr.mxu0 0.0
      %609 = vmatpush1.msra.mxu0 %v581
      %610 = vmatprep.subr.mxu0 0.0
      %611 = vmatpush1.msra.mxu0 %v582
      %612 = vmatprep.subr.mxu0 0.0
      %613 = vmatpush1.msra.mxu0 %v583
      %614 = vmatprep.subr.mxu0 0.0
      %615 = vmatpush1.msra.mxu0 %v584
      %616 = vmatprep.subr.mxu0 0.0
      %617 = vmatpush1.msra.mxu0 %v585
      %618 = vmatprep.subr.mxu0 0.0
      %619 = vmatpush1.msra.mxu0 %v586
      %620 = vmatprep.subr.mxu0 0.0
      %621 = vmatpush1.msra.mxu0 %v587
      %622 = vmatprep.subr.mxu0 0.0
      %623 = vmatpush1.msra.mxu0 %v588
      %624 = vmatprep.subr.mxu0 0.0
      %625 = vmatpush1.msra.mxu0 %v589
      %626 = vmatprep.subr.mxu0 0.0
      %627 = vmatpush1.msra.mxu0 %v590
      %628 = vmatprep.subr.mxu0 0.0
      %629 = vmatpush1.msra.mxu0 %v591
      %630 = vmatprep.subr.mxu0 0.0
      %631 = vmatpush1.msra.mxu0 %v592
      %632 = vmatprep.subr.mxu0 0.0
      %633 = vmatpush1.msra.mxu0 0.0
      %634 = vmatprep.subr.mxu0 0.0
      %635 = vmatpush1.msra.mxu0 0.0
      %636 = vmatprep.subr.mxu0 0.0
      %637 = vmatpush1.msra.mxu0 0.0
      %638 = vmatprep.subr.mxu0 0.0
      %639 = vmatpush1.msra.mxu0 0.0
      %640 = vmatprep.subr.mxu0 0.0
      %641 = vmatpush1.msra.mxu0 0.0
      %642 = vmatprep.subr.mxu0 0.0
      %643 = vmatpush1.msra.mxu0 0.0
      %644 = vmatprep.subr.mxu0 0.0
      %645 = vmatpush1.msra.mxu0 0.0
      %646 = vmatprep.subr.mxu0 0.0
      %647 = vmatpush1.msra.mxu0 0.0
      %648 = vmatprep.subr.mxu0 0.0
      %649 = vmatpush1.msra.mxu0 0.0
      %650 = vmatprep.subr.mxu0 0.0
      %651 = vmatpush1.msra.mxu0 0.0
      %652 = vmatprep.subr.mxu0 0.0
      %653 = vmatpush1.msra.mxu0 0.0
      %654 = vmatprep.subr.mxu0 0.0
      %655 = vmatpush1.msra.mxu0 0.0
      %656 = vmatprep.subr.mxu0 0.0
      %657 = vmatpush1.msra.mxu0 0.0
      %658 = vmatprep.subr.mxu0 0.0
      %659 = vmatpush1.msra.mxu0 0.0
      %660 = vmatprep.subr.mxu0 0.0
      %661 = vmatpush1.msra.mxu0 0.0
      %662 = vmatprep.subr.mxu0 0.0
      %663 = vmatpush1.msra.mxu0 0.0
      %664 = vmatprep.mubr.f32.mxu0 0.0
      %665 = vmatmul.mubr.f32.gmra.mrb[0].mxu0 %v561
      %v666 = vpop.f32.mrb[0].mxu0
      %v667 = vadd.f32 %v598, %v666
      %v668 = vpop.f32.mrb[0].mxu0
      %669 = vmatprep.mubr.f32.mxu0 0.0
      %670 = vmatmul.mubr.f32.gmra.mrb[0].mxu0 %v562
      %v671 = vpop.f32.mrb[0].mxu0
      %v672 = vadd.f32 %v598, %v671
      %v673 = vpop.f32.mrb[0].mxu0
      %674 = vmatprep.mubr.f32.mxu0 0.0
      %675 = vmatmul.mubr.f32.gmra.mrb[0].mxu0 %v563
      %v676 = vpop.f32.mrb[0].mxu0
      %v677 = vadd.f32 %v598, %v676
      %v678 = vpop.f32.mrb[0].mxu0
      %679 = vmatprep.mubr.f32.mxu0 0.0
      %680 = vmatmul.mubr.f32.gmra.mrb[0].mxu0 %v564
      %v681 = vpop.f32.mrb[0].mxu0
      %v682 = vadd.f32 %v598, %v681
      %v683 = vpop.f32.mrb[0].mxu0
      %684 = vmatprep.mubr.f32.mxu0 0.0
      %685 = vmatmul.mubr.f32.gmra.mrb[0].mxu0 %v565
      %v686 = vpop.f32.mrb[0].mxu0
      %v687 = vadd.f32 %v598, %v686
      %v688 = vpop.f32.mrb[0].mxu0
      %689 = vmatprep.mubr.f32.mxu0 0.0
      %690 = vmatmul.mubr.f32.gmra.mrb[0].mxu0 %v566
      %v691 = vpop.f32.mrb[0].mxu0
      %v692 = vadd.f32 %v598, %v691
      %v693 = vpop.f32.mrb[0].mxu0
      %694 = vmatprep.mubr.f32.mxu0 0.0
      %695 = vmatmul.mubr.f32.gmra.mrb[0].mxu0 %v567
      %v696 = vpop.f32.mrb[0].mxu0
      %v697 = vadd.f32 %v598, %v696
      %v698 = vpop.f32.mrb[0].mxu0
      %699 = vmatprep.mubr.f32.mxu0 0.0
      %700 = vmatmul.mubr.f32.gmra.mrb[0].mxu0 %v568
      %v701 = vpop.f32.mrb[0].mxu0
      %v702 = vadd.f32 %v598, %v701
      %v703 = vpop.f32.mrb[0].mxu0
      %704 = vmatprep.mubr.f32.mxu0 0.0
      %705 = vmatmul.mubr.f32.gmra.mrb[0].mxu0 %v569
      %v706 = vpop.f32.mrb[0].mxu0
      %v707 = vadd.f32 %v598, %v706
      %v708 = vpop.f32.mrb[0].mxu0
      %709 = vmatprep.mubr.f32.mxu0 0.0
      %710 = vmatmul.mubr.f32.gmra.mrb[0].mxu0 %v570
      %v711 = vpop.f32.mrb[0].mxu0
      %v712 = vadd.f32 %v598, %v711
      %v713 = vpop.f32.mrb[0].mxu0
      %714 = vmatprep.mubr.f32.mxu0 0.0
      %715 = vmatmul.mubr.f32.gmra.mrb[0].mxu0 %v571
      %v716 = vpop.f32.mrb[0].mxu0
      %v717 = vadd.f32 %v598, %v716
      %v718 = vpop.f32.mrb[0].mxu0
      %719 = vmatprep.mubr.f32.mxu0 0.0
      %720 = vmatmul.mubr.f32.gmra.mrb[0].mxu0 %v572
      %v721 = vpop.f32.mrb[0].mxu0
      %v722 = vadd.f32 %v598, %v721
      %v723 = vpop.f32.mrb[0].mxu0
      %724 = vmatprep.mubr.f32.mxu0 0.0
      %725 = vmatmul.mubr.f32.gmra.mrb[0].mxu0 %v573
      %v726 = vpop.f32.mrb[0].mxu0
      %v727 = vadd.f32 %v598, %v726
      %v728 = vpop.f32.mrb[0].mxu0
      %729 = vmatprep.mubr.f32.mxu0 0.0
      %730 = vmatmul.mubr.f32.gmra.mrb[0].mxu0 %v574
      %v731 = vpop.f32.mrb[0].mxu0
      %v732 = vadd.f32 %v598, %v731
      %v733 = vpop.f32.mrb[0].mxu0
      %734 = vmatprep.mubr.f32.mxu0 0.0
      %735 = vmatmul.mubr.f32.gmra.mrb[0].mxu0 %v575
      %v736 = vpop.f32.mrb[0].mxu0
      %v737 = vadd.f32 %v598, %v736
      %v738 = vpop.f32.mrb[0].mxu0
      %739 = vmatprep.mubr.f32.mxu0 0.0
      %740 = vmatmul.mubr.f32.gmra.mrb[0].mxu0 %v576
      %v741 = vpop.f32.mrb[0].mxu0
      %v742 = vadd.f32 %v598, %v741
      %v743 = vpop.f32.mrb[0].mxu0
      %744 = vdwg.mxu0
      %v745 = vmax.f32 %v667, 0.0
      %v746 = vmax.f32 %v672, 0.0
      %v747 = vmax.f32 %v677, 0.0
      %v748 = vmax.f32 %v682, 0.0
      %v749 = vmax.f32 %v687, 0.0
      %v750 = vmax.f32 %v692, 0.0
      %v751 = vmax.f32 %v697, 0.0
      %v752 = vmax.f32 %v702, 0.0
      %v753 = vmax.f32 %v707, 0.0
      %v754 = vmax.f32 %v712, 0.0
      %v755 = vmax.f32 %v717, 0.0
      %v756 = vmax.f32 %v722, 0.0
      %v757 = vmax.f32 %v727, 0.0
      %v758 = vmax.f32 %v732, 0.0
      %v759 = vmax.f32 %v737, 0.0
      %v760 = vmax.f32 %v742, 0.0
      %v761 = vld [vmem:[%s5] sm:$0xff]
      %v762 = vld [vmem:[%s5 + $0x8] sm:$0xff]
      %v763 = vld [vmem:[%s5 + $0x10] sm:$0xff]
      %v764 = vld [vmem:[%s5 + $0x18] sm:$0xff]
      %v765 = vld [vmem:[%s5 + $0x20] sm:$0xff]
      %v766 = vld [vmem:[%s5 + $0x28] sm:$0xff]
      %v767 = vld [vmem:[%s5 + $0x30] sm:$0xff]
      %v768 = vld [vmem:[%s5 + $0x38] sm:$0xff]
      %v769 = vld [vmem:[%s5 + $0x40] sm:$0xff]
      %v770 = vld [vmem:[%s5 + $0x48] sm:$0xff]
      %v771 = vld [vmem:[%s5 + $0x50] sm:$0xff]
      %v772 = vld [vmem:[%s5 + $0x58] sm:$0xff]
      %v773 = vld [vmem:[%s5 + $0x60] sm:$0xff]
      %v774 = vld [vmem:[%s5 + $0x68] sm:$0xff]
      %v775 = vld [vmem:[%s5 + $0x70] sm:$0xff]
      %v776 = vld [vmem:[%s5 + $0x78] sm:$0xff]
      %v777 = vld [vmem:[%s6] sm:$0x1]
      %v779 = vlaneseq
      %v780 = vshrl.u32 %v779, 7
      %v781 = vsub.s32 0, %v780
      %v782 = vrot.slane %v777, %v781
      %784 = vmatprep.subr.mxu0 0.0
      %785 = vmatpush1.msra.mxu0 %v761
      %786 = vmatprep.subr.mxu0 0.0
      %787 = vmatpush1.msra.mxu0 %v762
      %788 = vmatprep.subr.mxu0 0.0
      %789 = vmatpush1.msra.mxu0 %v763
      %790 = vmatprep.subr.mxu0 0.0
      %791 = vmatpush1.msra.mxu0 %v764
      %792 = vmatprep.subr.mxu0 0.0
      %793 = vmatpush1.msra.mxu0 %v765
      %794 = vmatprep.subr.mxu0 0.0
      %795 = vmatpush1.msra.mxu0 %v766
      %796 = vmatprep.subr.mxu0 0.0
      %797 = vmatpush1.msra.mxu0 %v767
      %798 = vmatprep.subr.mxu0 0.0
      %799 = vmatpush1.msra.mxu0 %v768
      %800 = vmatprep.subr.mxu0 0.0
      %801 = vmatpush1.msra.mxu0 %v769
      %802 = vmatprep.subr.mxu0 0.0
      %803 = vmatpush1.msra.mxu0 %v770
      %804 = vmatprep.subr.mxu0 0.0
      %805 = vmatpush1.msra.mxu0 %v771
      %806 = vmatprep.subr.mxu0 0.0
      %807 = vmatpush1.msra.mxu0 %v772
      %808 = vmatprep.subr.mxu0 0.0
      %809 = vmatpush1.msra.mxu0 %v773
      %810 = vmatprep.subr.mxu0 0.0
      %811 = vmatpush1.msra.mxu0 %v774
      %812 = vmatprep.subr.mxu0 0.0
      %813 = vmatpush1.msra.mxu0 %v775
      %814 = vmatprep.subr.mxu0 0.0
      %815 = vmatpush1.msra.mxu0 %v776
      %816 = vmatprep.subr.mxu0 0.0
      %817 = vmatpush1.msra.mxu0 0.0
      %818 = vmatprep.subr.mxu0 0.0
      %819 = vmatpush1.msra.mxu0 0.0
      %820 = vmatprep.subr.mxu0 0.0
      %821 = vmatpush1.msra.mxu0 0.0
      %822 = vmatprep.subr.mxu0 0.0
      %823 = vmatpush1.msra.mxu0 0.0
      %824 = vmatprep.subr.mxu0 0.0
      %825 = vmatpush1.msra.mxu0 0.0
      %826 = vmatprep.subr.mxu0 0.0
      %827 = vmatpush1.msra.mxu0 0.0
      %828 = vmatprep.subr.mxu0 0.0
      %829 = vmatpush1.msra.mxu0 0.0
      %830 = vmatprep.subr.mxu0 0.0
      %831 = vmatpush1.msra.mxu0 0.0
      %832 = vmatprep.subr.mxu0 0.0
      %833 = vmatpush1.msra.mxu0 0.0
      %834 = vmatprep.subr.mxu0 0.0
      %835 = vmatpush1.msra.mxu0 0.0
      %836 = vmatprep.subr.mxu0 0.0
      %837 = vmatpush1.msra.mxu0 0.0
      %838 = vmatprep.subr.mxu0 0.0
      %839 = vmatpush1.msra.mxu0 0.0
      %840 = vmatprep.subr.mxu0 0.0
      %841 = vmatpush1.msra.mxu0 0.0
      %842 = vmatprep.subr.mxu0 0.0
      %843 = vmatpush1.msra.mxu0 0.0
      %844 = vmatprep.subr.mxu0 0.0
      %845 = vmatpush1.msra.mxu0 0.0
      %846 = vmatprep.subr.mxu0 0.0
      %847 = vmatpush1.msra.mxu0 0.0
      %848 = vmatprep.mubr.f32.mxu0 0.0
      %849 = vmatmul.mubr.f32.gmra.mrb[0].mxu0 %v745
      %v850 = vpop.f32.mrb[0].mxu0
      %v851 = vadd.f32 %v782, %v850
      %v852 = vpop.f32.mrb[0].mxu0
      %853 = vmatprep.mubr.f32.mxu0 0.0
      %854 = vmatmul.mubr.f32.gmra.mrb[0].mxu0 %v746
      %v855 = vpop.f32.mrb[0].mxu0
      %v856 = vadd.f32 %v782, %v855
      %v857 = vpop.f32.mrb[0].mxu0
      %858 = vmatprep.mubr.f32.mxu0 0.0
      %859 = vmatmul.mubr.f32.gmra.mrb[0].mxu0 %v747
      %v860 = vpop.f32.mrb[0].mxu0
      %v861 = vadd.f32 %v782, %v860
      %v862 = vpop.f32.mrb[0].mxu0
      %863 = vmatprep.mubr.f32.mxu0 0.0
      %864 = vmatmul.mubr.f32.gmra.mrb[0].mxu0 %v748
      %v865 = vpop.f32.mrb[0].mxu0
      %v866 = vadd.f32 %v782, %v865
      %v867 = vpop.f32.mrb[0].mxu0
      %868 = vmatprep.mubr.f32.mxu0 0.0
      %869 = vmatmul.mubr.f32.gmra.mrb[0].mxu0 %v749
      %v870 = vpop.f32.mrb[0].mxu0
      %v871 = vadd.f32 %v782, %v870
      %v872 = vpop.f32.mrb[0].mxu0
      %873 = vmatprep.mubr.f32.mxu0 0.0
      %874 = vmatmul.mubr.f32.gmra.mrb[0].mxu0 %v750
      %v875 = vpop.f32.mrb[0].mxu0
      %v876 = vadd.f32 %v782, %v875
      %v877 = vpop.f32.mrb[0].mxu0
      %878 = vmatprep.mubr.f32.mxu0 0.0
      %879 = vmatmul.mubr.f32.gmra.mrb[0].mxu0 %v751
      %v880 = vpop.f32.mrb[0].mxu0
      %v881 = vadd.f32 %v782, %v880
      %v882 = vpop.f32.mrb[0].mxu0
      %883 = vmatprep.mubr.f32.mxu0 0.0
      %884 = vmatmul.mubr.f32.gmra.mrb[0].mxu0 %v752
      %v885 = vpop.f32.mrb[0].mxu0
      %v886 = vadd.f32 %v782, %v885
      %v887 = vpop.f32.mrb[0].mxu0
      %888 = vmatprep.mubr.f32.mxu0 0.0
      %889 = vmatmul.mubr.f32.gmra.mrb[0].mxu0 %v753
      %v890 = vpop.f32.mrb[0].mxu0
      %v891 = vadd.f32 %v782, %v890
      %v892 = vpop.f32.mrb[0].mxu0
      %893 = vmatprep.mubr.f32.mxu0 0.0
      %894 = vmatmul.mubr.f32.gmra.mrb[0].mxu0 %v754
      %v895 = vpop.f32.mrb[0].mxu0
      %v896 = vadd.f32 %v782, %v895
      %v897 = vpop.f32.mrb[0].mxu0
      %898 = vmatprep.mubr.f32.mxu0 0.0
      %899 = vmatmul.mubr.f32.gmra.mrb[0].mxu0 %v755
      %v900 = vpop.f32.mrb[0].mxu0
      %v901 = vadd.f32 %v782, %v900
      %v902 = vpop.f32.mrb[0].mxu0
      %903 = vmatprep.mubr.f32.mxu0 0.0
      %904 = vmatmul.mubr.f32.gmra.mrb[0].mxu0 %v756
      %v905 = vpop.f32.mrb[0].mxu0
      %v906 = vadd.f32 %v782, %v905
      %v907 = vpop.f32.mrb[0].mxu0
      %908 = vmatprep.mubr.f32.mxu0 0.0
      %909 = vmatmul.mubr.f32.gmra.mrb[0].mxu0 %v757
      %v910 = vpop.f32.mrb[0].mxu0
      %v911 = vadd.f32 %v782, %v910
      %v912 = vpop.f32.mrb[0].mxu0
      %913 = vmatprep.mubr.f32.mxu0 0.0
      %914 = vmatmul.mubr.f32.gmra.mrb[0].mxu0 %v758
      %v915 = vpop.f32.mrb[0].mxu0
      %v916 = vadd.f32 %v782, %v915
      %v917 = vpop.f32.mrb[0].mxu0
      %918 = vmatprep.mubr.f32.mxu0 0.0
      %919 = vmatmul.mubr.f32.gmra.mrb[0].mxu0 %v759
      %v920 = vpop.f32.mrb[0].mxu0
      %v921 = vadd.f32 %v782, %v920
      %v922 = vpop.f32.mrb[0].mxu0
      %923 = vmatprep.mubr.f32.mxu0 0.0
      %924 = vmatmul.mubr.f32.gmra.mrb[0].mxu0 %v760
      %v925 = vpop.f32.mrb[0].mxu0
      %v926 = vadd.f32 %v782, %v925
      %v927 = vpop.f32.mrb[0].mxu0
      %928 = vdwg.mxu0
      %v929 = vmax.f32 %v851, 0.0
      %v930 = vmax.f32 %v856, 0.0
      %v931 = vmax.f32 %v861, 0.0
      %v932 = vmax.f32 %v866, 0.0
      %v933 = vmax.f32 %v871, 0.0
      %v934 = vmax.f32 %v876, 0.0
      %v935 = vmax.f32 %v881, 0.0
      %v936 = vmax.f32 %v886, 0.0
      %v937 = vmax.f32 %v891, 0.0
      %v938 = vmax.f32 %v896, 0.0
      %v939 = vmax.f32 %v901, 0.0
      %v940 = vmax.f32 %v906, 0.0
      %v941 = vmax.f32 %v911, 0.0
      %v942 = vmax.f32 %v916, 0.0
      %v943 = vmax.f32 %v921, 0.0
      %v944 = vmax.f32 %v926, 0.0
      %v945 = vld [vmem:[%s7] sm:$0x1]
      %v947 = vlaneseq
      %v948 = vshrl.u32 %v947, 7
      %v949 = vsub.s32 0, %v948
      %v950 = vrot.slane %v945, %v949
      %v952 = vmul.f32 %v929, %v950
      %v953 = vmul.f32 %v930, %v950
      %v954 = vmul.f32 %v931, %v950
      %v955 = vmul.f32 %v932, %v950
      %v956 = vmul.f32 %v933, %v950
      %v957 = vmul.f32 %v934, %v950
      %v958 = vmul.f32 %v935, %v950
      %v959 = vmul.f32 %v936, %v950
      %v960 = vmul.f32 %v937, %v950
      %v961 = vmul.f32 %v938, %v950
      %v962 = vmul.f32 %v939, %v950
      %v963 = vmul.f32 %v940, %v950
      %v964 = vmul.f32 %v941, %v950
      %v965 = vmul.f32 %v942, %v950
      %v966 = vmul.f32 %v943, %v950
      %v967 = vmul.f32 %v944, %v950
      %vm968 = vcmask 523264
      %v969 = vsel %vm968, %v952, 0.0
      %970 = vadd.xlane.f32.xlu0 %v969
      %v971 = vpop.xlane.xlu0 %970
      %v972 = vsel %vm968, %v953, 0.0
      %973 = vadd.xlane.f32.xlu0 %v972
      %v974 = vpop.xlane.xlu0 %973
      %v975 = vsel %vm968, %v954, 0.0
      %976 = vadd.xlane.f32.xlu0 %v975
      %v977 = vpop.xlane.xlu0 %976
      %v978 = vsel %vm968, %v955, 0.0
      %979 = vadd.xlane.f32.xlu0 %v978
      %v980 = vpop.xlane.xlu0 %979
      %v981 = vsel %vm968, %v956, 0.0
      %982 = vadd.xlane.f32.xlu0 %v981
      %v983 = vpop.xlane.xlu0 %982
      %v984 = vsel %vm968, %v957, 0.0
      %985 = vadd.xlane.f32.xlu0 %v984
      %v986 = vpop.xlane.xlu0 %985
      %v987 = vsel %vm968, %v958, 0.0
      %988 = vadd.xlane.f32.xlu0 %v987
      %v989 = vpop.xlane.xlu0 %988
      %v990 = vsel %vm968, %v959, 0.0
      %991 = vadd.xlane.f32.xlu0 %v990
      %v992 = vpop.xlane.xlu0 %991
      %v993 = vsel %vm968, %v960, 0.0
      %994 = vadd.xlane.f32.xlu0 %v993
      %v995 = vpop.xlane.xlu0 %994
      %v996 = vsel %vm968, %v961, 0.0
      %997 = vadd.xlane.f32.xlu0 %v996
      %v998 = vpop.xlane.xlu0 %997
      %v999 = vsel %vm968, %v962, 0.0
      %1000 = vadd.xlane.f32.xlu0 %v999
      %v1001 = vpop.xlane.xlu0 %1000
      %v1002 = vsel %vm968, %v963, 0.0
      %1003 = vadd.xlane.f32.xlu0 %v1002
      %v1004 = vpop.xlane.xlu0 %1003
      %v1005 = vsel %vm968, %v964, 0.0
      %1006 = vadd.xlane.f32.xlu0 %v1005
      %v1007 = vpop.xlane.xlu0 %1006
      %v1008 = vsel %vm968, %v965, 0.0
      %1009 = vadd.xlane.f32.xlu0 %v1008
      %v1010 = vpop.xlane.xlu0 %1009
      %v1011 = vsel %vm968, %v966, 0.0
      %1012 = vadd.xlane.f32.xlu0 %v1011
      %v1013 = vpop.xlane.xlu0 %1012
      %v1014 = vsel %vm968, %v967, 0.0
      %1015 = vadd.xlane.f32.xlu0 %v1014
      %v1016 = vpop.xlane.xlu0 %1015
      %v1017 = vld [vmem:[#allocation2] sm:$0x1]
      %v1019 = vlaneseq
      %v1020 = vshrl.u32 %v1019, 7
      %v1021 = vsub.s32 0, %v1020
      %v1022 = vrot.slane %v1017, %v1021
      %v1024 = vadd.f32 %v971, %v1022
      %v1025 = vadd.f32 %v974, %v1022
      %v1026 = vadd.f32 %v977, %v1022
      %v1027 = vadd.f32 %v980, %v1022
      %v1028 = vadd.f32 %v983, %v1022
      %v1029 = vadd.f32 %v986, %v1022
      %v1030 = vadd.f32 %v989, %v1022
      %v1031 = vadd.f32 %v992, %v1022
      %v1032 = vadd.f32 %v995, %v1022
      %v1033 = vadd.f32 %v998, %v1022
      %v1034 = vadd.f32 %v1001, %v1022
      %v1035 = vadd.f32 %v1004, %v1022
      %v1036 = vadd.f32 %v1007, %v1022
      %v1037 = vadd.f32 %v1010, %v1022
      %v1038 = vadd.f32 %v1013, %v1022
      %v1039 = vadd.f32 %v1016, %v1022
      %vm1040 = vcmask 7168
      %1041 = vst.msk [vmem:[%s336] sm:$0xff] %vm1040, %v1024
      %1042 = vst.msk [vmem:[%s336 + $0x8] sm:$0xff] %vm1040, %v1025
      %1043 = vst.msk [vmem:[%s336 + $0x10] sm:$0xff] %vm1040, %v1026
      %1044 = vst.msk [vmem:[%s336 + $0x18] sm:$0xff] %vm1040, %v1027
      %1045 = vst.msk [vmem:[%s336 + $0x20] sm:$0xff] %vm1040, %v1028
      %1046 = vst.msk [vmem:[%s336 + $0x28] sm:$0xff] %vm1040, %v1029
      %1047 = vst.msk [vmem:[%s336 + $0x30] sm:$0xff] %vm1040, %v1030
      %1048 = vst.msk [vmem:[%s336 + $0x38] sm:$0xff] %vm1040, %v1031
      %1049 = vst.msk [vmem:[%s336 + $0x40] sm:$0xff] %vm1040, %v1032
      %1050 = vst.msk [vmem:[%s336 + $0x48] sm:$0xff] %vm1040, %v1033
      %1051 = vst.msk [vmem:[%s336 + $0x50] sm:$0xff] %vm1040, %v1034
      %1052 = vst.msk [vmem:[%s336 + $0x58] sm:$0xff] %vm1040, %v1035
      %1053 = vst.msk [vmem:[%s336 + $0x60] sm:$0xff] %vm1040, %v1036
      %1054 = vst.msk [vmem:[%s336 + $0x68] sm:$0xff] %vm1040, %v1037
      %1055 = vst.msk [vmem:[%s336 + $0x70] sm:$0xff] %vm1040, %v1038
      %1056 = vst.msk [vmem:[%s336 + $0x78] sm:$0xff] %vm1040, %v1039
      %s1057 = smul.u32 16, %s22
      %p1058 = scmp.lt.s32.totalorder %s1057, 63
      %s1059 = scalar_select %p1058, %s1057, 63
      %s1060 = smul.addr %s1059, 8
      %s1061 = scalar_lea.vmem %s9, %s1060
      // Predicated region
      $region57: #{tpu_custom_call.1} parent=55 // pred_check
        %p1062 = pneg %p234
      $region58: #{tpu_custom_call.1} parent=55 // pred_check_branch
        %1064 = sbr.rel (%p1062) target = $region60
      $region59: #{tpu_custom_call.1} parent=55 // pred_region
        %s1065 = smul.u32 16, %s22
      $region60: #{tpu_custom_call.1} parent=55 // pred_fallthru
        _
    $region56: #{tpu_custom_call.1} parent=5 // pred_fallthru
      _
    %p1066 = scmp.le.s32.totalorder 2, %s17
    // Predicated region
    $region61: #{tpu_custom_call.1} parent=5 // pred_check
      %p1067 = pneg %p1066
    $region62: #{tpu_custom_call.1} parent=5 // pred_check_branch
      %1069 = sbr.rel (%p1067) target = $region64
    $region63: #{tpu_custom_call.1} parent=5 // pred_region
      %s1070 = ssub.s32 %s17, 2
      // Predicated region
      $region65: #{tpu_custom_call.1} parent=63 // pred_check
        %p1071 = pneg %p240
      $region66: #{tpu_custom_call.1} parent=63 // pred_check_branch
        %1073 = sbr.rel (%p1071) target = $region68
      $region67: #{tpu_custom_call.1} parent=63 // pred_region
        %s1074 = smul.u32 16, %s23
        %p1075 = scmp.lt.s32.totalorder %s1074, 63
        %s1076 = scalar_select %p1075, %s1074, 63
        %s1077 = smul.addr %s1076, 8
        %s1078 = scalar_lea.vmem %s9, %s1077
      $region68: #{tpu_custom_call.1} parent=63 // pred_fallthru
        _
    $region64: #{tpu_custom_call.1} parent=5 // pred_fallthru
      _
  $region6: #{tpu_custom_call.1} parent=0 // loop_footer
    %s21 = sadd.s32 1, %s17
  $region7: #{tpu_custom_call.1} parent=0 // loop_footer_branch
    %16 = sbr.rel target = $region3
  $region8: #{tpu_custom_call.1} parent=0 // loop_exit
    _

</llo_original>
